<compile_context>
chip_gen: v7x
topology: tpu7x:2x2x1
jax: 0.10.0
libtpu: 0.0.40
codegen_flags: <defaults>
</compile_context>

<pallas_src>
import functools

import jax
import jax.numpy as jnp
from jax.experimental import pallas as pl
from jax.experimental.pallas import tpu as pltpu


def adapter_kernel(x_ref, wd_ref, bd_ref, wu_ref, bu_ref, o_ref, *, compute_dtype):
    """One row tile of: ReLU(x @ Wd^T + bd) @ Wu^T + bu.

    Weights arrive pre-transposed to NN form (wd_ref: (H, D), wu_ref: (D, H)),
    so both dots contract lhs dim 1 against rhs dim 0 (MXU-friendly, no
    in-kernel weight relayout). Biases are kept in f32.
    """
    x = x_ref[...].astype(compute_dtype)              # per-tile cast (free: VPU slack)
    z = jnp.dot(x, wd_ref[...], preferred_element_type=jnp.float32)
    z = jnp.maximum(z + bd_ref[...], 0.0)             # bias + ReLU in f32
    out = jnp.dot(z.astype(compute_dtype), wu_ref[...],
                  preferred_element_type=jnp.float32)
    o_ref[...] = (out + bu_ref[...]).astype(o_ref.dtype)


def _round_up(n, m):
    return ((n + m - 1) // m) * m


def _sublane_multiple(*dtypes):
    """Native row (sublane) multiple for the narrowest dtype involved."""
    m = 8
    for dt in dtypes:
        m = max(m, 8 * max(1, 4 // jnp.dtype(dt).itemsize))
    return m


def _vmem_capacity_bytes():
    # Hardware query only; fall back to the smallest per-core VMEM (v7x: 64 MiB)
    # so tile selection stays safe everywhere if the query is unavailable.
    try:
        return int(pltpu.get_tpu_info().vmem_capacity_bytes)
    except Exception:
        return 64 * 1024 * 1024


def _pick_row_tile(M, H, D, x_bytes, out_bytes, cmp_bytes, sub, vmem_budget,
                   target_tm=8192):
    """Largest row tile <= target_tm whose VMEM footprint fits the budget."""
    # Grid-invariant weights + biases (counted double-buffered to be safe).
    fixed = 2 * (2 * H * D * cmp_bytes + (D + H) * 4)

    def usage(tm):
        tiles = 2 * tm * H * (x_bytes + out_bytes)           # pipelined in/out buffers
        temps = tm * (H * 4 + D * 4 + (H + D) * cmp_bytes)   # f32 intermediates + casts
        return fixed + tiles + temps

    tm = _round_up(min(target_tm, M), sub)
    while tm > sub and usage(tm) > vmem_budget:
        tm = max(sub, _round_up(tm // 2, sub))
    return tm


def adapter_forward(x, w_down, b_down, w_up, b_up, *, tm=None,
                    compute_dtype=None, out_dtype=None, interpret=False):
    """Fused adapter forward on 2-D activations.

    x:      (M, H) activations (stays untouched in HBM; cast happens in-kernel).
    w_down: (D, H) torch nn.Linear weight (out, in).
    b_down: (D,)
    w_up:   (H, D) torch nn.Linear weight (out, in).
    b_up:   (H,)
    compute_dtype: e.g. jnp.bfloat16 to run the matmuls in bf16 (f32 accumulate).
    out_dtype:     writeback dtype (defaults to x.dtype).
    """
    M, H = x.shape
    D, H2 = w_down.shape
    assert H2 == H and w_up.shape == (H, D), "weights must be in torch (out, in) layout"

    compute_dtype = jnp.dtype(x.dtype if compute_dtype is None else compute_dtype)
    out_dtype = jnp.dtype(x.dtype if out_dtype is None else out_dtype)

    # Pre-transpose the (tiny) weights once -> NN matmul form inside the kernel.
    wd = w_down.T.astype(compute_dtype)                 # (H, D)
    wu = w_up.T.astype(compute_dtype)                   # (D, H)
    bd = b_down.astype(jnp.float32).reshape(1, D)
    bu = b_up.astype(jnp.float32).reshape(1, H)

    sub = _sublane_multiple(x.dtype, out_dtype, compute_dtype)
    cap = _vmem_capacity_bytes()

    if tm is None:
        tm = _pick_row_tile(M, H, D,
                            jnp.dtype(x.dtype).itemsize,
                            out_dtype.itemsize,
                            compute_dtype.itemsize,
                            sub, int(cap * 0.6))
        # v7x megacore: keep >= 2 (ideally ~8) grid steps when there is enough
        # work, but never shrink tiles below 1024 rows (per-step overhead).
        if M >= 2048:
            tm = min(tm, max(1024, _round_up(pl.cdiv(M, 8), sub)))
    tm = max(sub, _round_up(tm, sub))
    tm = min(tm, _round_up(M, sub))

    # Ragged last block (M % tm != 0) is handled by Pallas: padded reads,
    # masked writeback. No wrapper-side pad/slice -> no extra HBM passes.
    grid = (pl.cdiv(M, tm),)

    vmem_limit = min(int(cap * 0.85), 100 * 1024 * 1024)

    kernel = functools.partial(adapter_kernel, compute_dtype=compute_dtype)
    return pl.pallas_call(
        kernel,
        out_shape=jax.ShapeDtypeStruct((M, H), out_dtype),
        grid_spec=pltpu.PrefetchScalarGridSpec(
            num_scalar_prefetch=0,
            grid=grid,
            in_specs=[
                pl.BlockSpec((tm, H), lambda i: (i, 0)),   # x row tile
                pl.BlockSpec((H, D), lambda i: (0, 0)),    # w_down^T (grid-invariant)
                pl.BlockSpec((1, D), lambda i: (0, 0)),    # b_down
                pl.BlockSpec((D, H), lambda i: (0, 0)),    # w_up^T   (grid-invariant)
                pl.BlockSpec((1, H), lambda i: (0, 0)),    # b_up
            ],
            out_specs=pl.BlockSpec((tm, H), lambda i: (i, 0)),
        ),
        compiler_params=pltpu.CompilerParams(
            dimension_semantics=("parallel",),
            vmem_limit_bytes=vmem_limit,
        ),
        interpret=interpret,
    )(x, wd, bd, wu, bu)


def adapter_apply(x, w_down, b_down, w_up, b_up, **kwargs):
    """Adapter forward for arbitrary leading dims (..., H)."""
    lead = x.shape[:-1]
    H = x.shape[-1]
    out = adapter_forward(x.reshape(-1, H), w_down, b_down, w_up, b_up, **kwargs)
    return out.reshape(*lead, H)


if __name__ == "__main__":
    # Shapes consistent with the module: hidden=128, reduction_factor=16 -> D=8.
    batch, seq, hidden = 2, 8, 128
    reduction_factor = 16
    down = hidden // reduction_factor

    key = jax.random.PRNGKey(0)
    kx, kwd, kbd, kwu, kbu, kx2 = jax.random.split(key, 6)

    x = jax.random.normal(kx, (batch, seq, hidden), dtype=jnp.float32)
    # torch nn.Linear layouts: weight (out, in), bias (out,)
    w_down = jax.random.normal(kwd, (down, hidden), dtype=jnp.float32) * 0.05
    b_down = jax.random.normal(kbd, (down,), dtype=jnp.float32) * 0.05
    w_up = jax.random.normal(kwu, (hidden, down), dtype=jnp.float32) * 0.05
    b_up = jax.random.normal(kbu, (hidden,), dtype=jnp.float32) * 0.05

    def reference(xv):
        z = jnp.maximum(xv @ w_down.T + b_down, 0.0)
        return z @ w_up.T + b_up

    # 1) f32 path on the module's natural (batch, seq, hidden) shape.
    out = adapter_apply(x, w_down, b_down, w_up, b_up)
    jax.block_until_ready(out)
    assert out.shape == x.shape
    assert jnp.allclose(out, reference(x), atol=1e-5, rtol=1e-5), "f32 mismatch"

    # 2) Ragged row count with a multi-step grid (exercises the masked last block).
    x_ragged = jax.random.normal(kx2, (19, hidden), dtype=jnp.float32)
    out_r = adapter_forward(x_ragged, w_down, b_down, w_up, b_up, tm=8)
    jax.block_until_ready(out_r)
    assert out_r.shape == x_ragged.shape
    assert jnp.allclose(out_r, reference(x_ragged), atol=1e-5, rtol=1e-5), "ragged mismatch"

    # 3) bf16 compute path (f32 accumulate; x cast per-tile inside the kernel).
    out_bf = adapter_apply(x, w_down, b_down, w_up, b_up, compute_dtype=jnp.bfloat16)
    jax.block_until_ready(out_bf)
    assert jnp.allclose(out_bf, reference(x), atol=5e-2, rtol=5e-2), "bf16 mismatch"

    print("KERNEL_OK")
</pallas_src>

<mosaic_0001>
module attributes {stable_mosaic.version = 11 : i64} {
  func.func @adapter_kernel(%arg0: i32, %arg1: memref<16x128xf32, #tpu.memory_space<vmem>>, %arg2: memref<128x8xf32, #tpu.memory_space<vmem>>, %arg3: memref<1x8xf32, #tpu.memory_space<vmem>>, %arg4: memref<8x128xf32, #tpu.memory_space<vmem>>, %arg5: memref<1x128xf32, #tpu.memory_space<vmem>>, %arg6: memref<16x128xf32, #tpu.memory_space<vmem>>) attributes {dimension_semantics = [#tpu.dimension_semantics<parallel>], iteration_bounds = array<i64: 1>, scalar_prefetch = 0 : i64, scratch_operands = 0 : i64, tpu.core_type = #tpu.core_type<tc>, window_params = [{transform_indices = @transform_0, window_bounds = array<i64: 16, 128>}, {pipeline_mode = #tpu.pipeline_mode<synchronous>, transform_indices = @transform_1, window_bounds = array<i64: 128, 8>}, {pipeline_mode = #tpu.pipeline_mode<synchronous>, transform_indices = @transform_2, window_bounds = array<i64: 1, 8>}, {pipeline_mode = #tpu.pipeline_mode<synchronous>, transform_indices = @transform_3, window_bounds = array<i64: 8, 128>}, {pipeline_mode = #tpu.pipeline_mode<synchronous>, transform_indices = @transform_4, window_bounds = array<i64: 1, 128>}, {transform_indices = @transform_5, window_bounds = array<i64: 16, 128>}]} {
    %c0 = arith.constant 0 : index
    %c0_0 = arith.constant 0 : index
    %0 = vector.load %arg1[%c0, %c0_0] : memref<16x128xf32, #tpu.memory_space<vmem>>, vector<16x128xf32>
    %c0_1 = arith.constant 0 : index
    %c0_2 = arith.constant 0 : index
    %1 = vector.load %arg2[%c0_1, %c0_2] : memref<128x8xf32, #tpu.memory_space<vmem>>, vector<128x8xf32>
    %cst = arith.constant dense<0.000000e+00> : vector<16x8xf32>
    %2 = tpu.matmul %0, %1, %cst {dimension_numbers = #tpu.dot_dimension_numbers<[1], [0], [0], [1], [0, 0, 1, 1], [], []>} : vector<16x128xf32>, vector<128x8xf32>, vector<16x8xf32> -> vector<16x8xf32>
    %c0_3 = arith.constant 0 : index
    %c0_4 = arith.constant 0 : index
    %3 = vector.load %arg3[%c0_3, %c0_4] : memref<1x8xf32, #tpu.memory_space<vmem>>, vector<1x8xf32>
    %4 = vector.broadcast %3 : vector<1x8xf32> to vector<16x8xf32>
    %5 = arith.addf %2, %4 : vector<16x8xf32>
    %cst_5 = arith.constant 0.000000e+00 : f32
    %6 = vector.broadcast %cst_5 : f32 to vector<16x8xf32>
    %7 = arith.maximumf %5, %6 : vector<16x8xf32>
    %c0_6 = arith.constant 0 : index
    %c0_7 = arith.constant 0 : index
    %8 = vector.load %arg4[%c0_6, %c0_7] : memref<8x128xf32, #tpu.memory_space<vmem>>, vector<8x128xf32>
    %cst_8 = arith.constant dense<0.000000e+00> : vector<16x128xf32>
    %9 = tpu.matmul %7, %8, %cst_8 {dimension_numbers = #tpu.dot_dimension_numbers<[1], [0], [0], [1], [0, 0, 1, 1], [], []>} : vector<16x8xf32>, vector<8x128xf32>, vector<16x128xf32> -> vector<16x128xf32>
    %c0_9 = arith.constant 0 : index
    %c0_10 = arith.constant 0 : index
    %10 = vector.load %arg5[%c0_9, %c0_10] : memref<1x128xf32, #tpu.memory_space<vmem>>, vector<1x128xf32>
    %11 = vector.broadcast %10 : vector<1x128xf32> to vector<16x128xf32>
    %12 = arith.addf %9, %11 : vector<16x128xf32>
    %c0_11 = arith.constant 0 : index
    %c0_12 = arith.constant 0 : index
    %13 = vector.load %arg6[%c0_11, %c0_12] : memref<16x128xf32, #tpu.memory_space<vmem>>, vector<16x128xf32>
    tpu.vector_store %arg6[%c0_11, %c0_12], %12 {strides = array<i32>} : memref<16x128xf32, #tpu.memory_space<vmem>>, vector<16x128xf32>,
    return
  }
  func.func @transform_0(%arg0: i32) -> (i32, i32) {
    %c0_i32 = arith.constant 0 : i32
    %c0_i32_0 = arith.constant 0 : i32
    return %arg0, %c0_i32 : i32, i32
  }
  func.func @transform_1(%arg0: i32) -> (i32, i32) {
    %c0_i32 = arith.constant 0 : i32
    %c0_i32_0 = arith.constant 0 : i32
    %c0_i32_1 = arith.constant 0 : i32
    return %c0_i32, %c0_i32_0 : i32, i32
  }
  func.func @transform_2(%arg0: i32) -> (i32, i32) {
    %c0_i32 = arith.constant 0 : i32
    %c0_i32_0 = arith.constant 0 : i32
    %c0_i32_1 = arith.constant 0 : i32
    return %c0_i32, %c0_i32_0 : i32, i32
  }
  func.func @transform_3(%arg0: i32) -> (i32, i32) {
    %c0_i32 = arith.constant 0 : i32
    %c0_i32_0 = arith.constant 0 : i32
    %c0_i32_1 = arith.constant 0 : i32
    return %c0_i32, %c0_i32_0 : i32, i32
  }
  func.func @transform_4(%arg0: i32) -> (i32, i32) {
    %c0_i32 = arith.constant 0 : i32
    %c0_i32_0 = arith.constant 0 : i32
    %c0_i32_1 = arith.constant 0 : i32
    return %c0_i32, %c0_i32_0 : i32, i32
  }
  func.func @transform_5(%arg0: i32) -> (i32, i32) {
    %c0_i32 = arith.constant 0 : i32
    %c0_i32_0 = arith.constant 0 : i32
    return %arg0, %c0_i32 : i32, i32
  }
}

</mosaic_0001>

<llo_original>
// kernel: tpu_custom_call.1
$region0: #{tpu_custom_call.1}
  #allocation0 [shape = 'u32[]', space=smem, size = 0x4, offset = 0x4, fixed_abs, tag = 'smem constant byte address 0x4 - core index']
  #allocation1 [shape = 'u32[144,128]{1,0:T(1,128)}', space=vmem, size = 0x12000, scoped, tag = 'internal scratch']
  %s0 = inlined_call_operand.vmem [shape: f32[16,128], index: 0, kind: input, shape index: {}]
  %s1 = inlined_call_operand.vmem [shape: f32[128,8], index: 1, kind: input, shape index: {}]
  %s2 = inlined_call_operand.vmem [shape: f32[1,8], index: 2, kind: input, shape index: {}]
  %s3 = inlined_call_operand.vmem [shape: f32[8,128], index: 3, kind: input, shape index: {}]
  %s4 = inlined_call_operand.vmem [shape: f32[1,128], index: 4, kind: input, shape index: {}]
  %s5 = inlined_call_operand.hbm [shape: f32[16,128], index: 5, kind: output, shape index: {}]
  %s6 = sld [smem:[#allocation0]]
  $region30: #{tpu_custom_call.1} parent=0
    _
  %s8 = ssub.s32 1, %s6
  %s9 = scalar_select 0, %s8, %s6
  $region1: #{tpu_custom_call.1} parent=0
    #allocation2 [shape = 'u8[8192]{0}', space=vmem, size = 0x2000, scoped, tag = 'output window, operand 0, single buffered']
    #allocation3 [shape = 's32[1]{0}', space=sflag, size = 0x4, scoped, tag = 'scoped memory for tpu_custom_call.1']
    %10 = vsyncpa [#allocation3], 0
    // Predicated region
    $region2: #{tpu_custom_call.1} parent=1 // pred_check
      _
    $region3: #{tpu_custom_call.1} parent=1 // pred_check_branch
      %12 = sbr.rel (0) target = $region5
    $region4: #{tpu_custom_call.1} parent=1 // pred_region
      _
    $region5: #{tpu_custom_call.1} parent=1 // pred_fallthru
      _
    // Predicated region
    $region6: #{tpu_custom_call.1} parent=1 // pred_check
      _
    $region7: #{tpu_custom_call.1} parent=1 // pred_check_branch
      %14 = sbr.rel (0) target = $region9
    $region8: #{tpu_custom_call.1} parent=1 // pred_region
      _
    $region9: #{tpu_custom_call.1} parent=1 // pred_fallthru
      _
    // Predicated region
    $region10: #{tpu_custom_call.1} parent=1 // pred_check
      _
    $region11: #{tpu_custom_call.1} parent=1 // pred_check_branch
      %16 = sbr.rel (0) target = $region13
    $region12: #{tpu_custom_call.1} parent=1 // pred_region
      _
    $region13: #{tpu_custom_call.1} parent=1 // pred_fallthru
      _
    // Predicated region
    $region14: #{tpu_custom_call.1} parent=1 // pred_check
      _
    $region15: #{tpu_custom_call.1} parent=1 // pred_check_branch
      %18 = sbr.rel (0) target = $region17
    $region16: #{tpu_custom_call.1} parent=1 // pred_region
      _
    $region17: #{tpu_custom_call.1} parent=1 // pred_fallthru
      _
    // Predicated region
    $region18: #{tpu_custom_call.1} parent=1 // pred_check
      _
    $region19: #{tpu_custom_call.1} parent=1 // pred_check_branch
      %20 = sbr.rel (0) target = $region21
    $region20: #{tpu_custom_call.1} parent=1 // pred_region
      _
    $region21: #{tpu_custom_call.1} parent=1 // pred_fallthru
      _
    %v21 = vld [vmem:[%s0] sm:$0xff]
    %v22 = vld [vmem:[%s0 + $0x8] sm:$0xff]
    %v23 = vld [vmem:[%s1] sm:$0xff]
    %v24 = vld [vmem:[%s1 + $0x8] sm:$0xff]
    %v25 = vld [vmem:[%s1 + $0x10] sm:$0xff]
    %v26 = vld [vmem:[%s1 + $0x18] sm:$0xff]
    %v27 = vld [vmem:[%s1 + $0x20] sm:$0xff]
    %v28 = vld [vmem:[%s1 + $0x28] sm:$0xff]
    %v29 = vld [vmem:[%s1 + $0x30] sm:$0xff]
    %v30 = vld [vmem:[%s1 + $0x38] sm:$0xff]
    %v31 = vld [vmem:[%s1 + $0x40] sm:$0xff]
    %v32 = vld [vmem:[%s1 + $0x48] sm:$0xff]
    %v33 = vld [vmem:[%s1 + $0x50] sm:$0xff]
    %v34 = vld [vmem:[%s1 + $0x58] sm:$0xff]
    %v35 = vld [vmem:[%s1 + $0x60] sm:$0xff]
    %v36 = vld [vmem:[%s1 + $0x68] sm:$0xff]
    %v37 = vld [vmem:[%s1 + $0x70] sm:$0xff]
    %v38 = vld [vmem:[%s1 + $0x78] sm:$0xff]
    %v39 = vld [vmem:[%s2] sm:$0x1]
    %v41 = vlaneseq
    %v42 = vshrl.u32 %v41, 7
    %v43 = vsub.s32 0, %v42
    %v44 = vrot.slane %v39, %v43
    %46 = vmatprep.subr.mxu0 0.0
    %47 = vmatpush1.msra.mxu0 %v23
    %48 = vmatprep.subr.mxu0 0.0
    %49 = vmatpush1.msra.mxu0 %v24
    %50 = vmatprep.subr.mxu0 0.0
    %51 = vmatpush1.msra.mxu0 %v25
    %52 = vmatprep.subr.mxu0 0.0
    %53 = vmatpush1.msra.mxu0 %v26
    %54 = vmatprep.subr.mxu0 0.0
    %55 = vmatpush1.msra.mxu0 %v27
    %56 = vmatprep.subr.mxu0 0.0
    %57 = vmatpush1.msra.mxu0 %v28
    %58 = vmatprep.subr.mxu0 0.0
    %59 = vmatpush1.msra.mxu0 %v29
    %60 = vmatprep.subr.mxu0 0.0
    %61 = vmatpush1.msra.mxu0 %v30
    %62 = vmatprep.subr.mxu0 0.0
    %63 = vmatpush1.msra.mxu0 %v31
    %64 = vmatprep.subr.mxu0 0.0
    %65 = vmatpush1.msra.mxu0 %v32
    %66 = vmatprep.subr.mxu0 0.0
    %67 = vmatpush1.msra.mxu0 %v33
    %68 = vmatprep.subr.mxu0 0.0
    %69 = vmatpush1.msra.mxu0 %v34
    %70 = vmatprep.subr.mxu0 0.0
    %71 = vmatpush1.msra.mxu0 %v35
    %72 = vmatprep.subr.mxu0 0.0
    %73 = vmatpush1.msra.mxu0 %v36
    %74 = vmatprep.subr.mxu0 0.0
    %75 = vmatpush1.msra.mxu0 %v37
    %76 = vmatprep.subr.mxu0 0.0
    %77 = vmatpush1.msra.mxu0 %v38
    %78 = vmatprep.subr.mxu0 0.0
    %79 = vmatpush1.msra.mxu0 0.0
    %80 = vmatprep.subr.mxu0 0.0
    %81 = vmatpush1.msra.mxu0 0.0
    %82 = vmatprep.subr.mxu0 0.0
    %83 = vmatpush1.msra.mxu0 0.0
    %84 = vmatprep.subr.mxu0 0.0
    %85 = vmatpush1.msra.mxu0 0.0
    %86 = vmatprep.subr.mxu0 0.0
    %87 = vmatpush1.msra.mxu0 0.0
    %88 = vmatprep.subr.mxu0 0.0
    %89 = vmatpush1.msra.mxu0 0.0
    %90 = vmatprep.subr.mxu0 0.0
    %91 = vmatpush1.msra.mxu0 0.0
    %92 = vmatprep.subr.mxu0 0.0
    %93 = vmatpush1.msra.mxu0 0.0
    %94 = vmatprep.subr.mxu0 0.0
    %95 = vmatpush1.msra.mxu0 0.0
    %96 = vmatprep.subr.mxu0 0.0
    %97 = vmatpush1.msra.mxu0 0.0
    %98 = vmatprep.subr.mxu0 0.0
    %99 = vmatpush1.msra.mxu0 0.0
    %100 = vmatprep.subr.mxu0 0.0
    %101 = vmatpush1.msra.mxu0 0.0
    %102 = vmatprep.subr.mxu0 0.0
    %103 = vmatpush1.msra.mxu0 0.0
    %104 = vmatprep.subr.mxu0 0.0
    %105 = vmatpush1.msra.mxu0 0.0
    %106 = vmatprep.subr.mxu0 0.0
    %107 = vmatpush1.msra.mxu0 0.0
    %108 = vmatprep.subr.mxu0 0.0
    %109 = vmatpush1.msra.mxu0 0.0
    %110 = vmatprep.mubr.f32.mxu0 0.0
    %111 = vmatmul.mubr.f32.gmra.mrb[0].mxu0 %v21
    %v112 = vpop.f32.mrb[0].mxu0
    %v113 = vadd.f32 %v44, %v112
    %v114 = vpop.f32.mrb[0].mxu0
    %115 = vmatprep.mubr.f32.mxu0 0.0
    %116 = vmatmul.mubr.f32.gmra.mrb[0].mxu0 %v22
    %v117 = vpop.f32.mrb[0].mxu0
    %v118 = vadd.f32 %v44, %v117
    %v119 = vpop.f32.mrb[0].mxu0
    %120 = vdwg.mxu0
    %v121 = vmax.f32 %v113, 0.0
    %v122 = vmax.f32 %v118, 0.0
    %v123 = vld [vmem:[%s3] sm:$0xff]
    %v124 = vld [vmem:[%s4] sm:$0x1]
    %v126 = vlaneseq
    %v127 = vshrl.u32 %v126, 7
    %v128 = vsub.s32 0, %v127
    %v129 = vrot.slane %v124, %v128
    %vm131 = vcmask 64512
    %v133 = vsel %vm131, %v121, 0
    %v136 = vsel %vm131, %v122, 0
    %138 = vmatprep.subr.mxu0 0.0
    %139 = vmatpush1.msra.mxu0 %v123
    %140 = vmatprep.subr.mxu0 0.0
    %141 = vmatpush1.msra.mxu0 0.0
    %142 = vmatprep.subr.mxu0 0.0
    %143 = vmatpush1.msra.mxu0 0.0
    %144 = vmatprep.subr.mxu0 0.0
    %145 = vmatpush1.msra.mxu0 0.0
    %146 = vmatprep.subr.mxu0 0.0
    %147 = vmatpush1.msra.mxu0 0.0
    %148 = vmatprep.subr.mxu0 0.0
    %149 = vmatpush1.msra.mxu0 0.0
    %150 = vmatprep.subr.mxu0 0.0
    %151 = vmatpush1.msra.mxu0 0.0
    %152 = vmatprep.subr.mxu0 0.0
    %153 = vmatpush1.msra.mxu0 0.0
    %154 = vmatprep.subr.mxu0 0.0
    %155 = vmatpush1.msra.mxu0 0.0
    %156 = vmatprep.subr.mxu0 0.0
    %157 = vmatpush1.msra.mxu0 0.0
    %158 = vmatprep.subr.mxu0 0.0
    %159 = vmatpush1.msra.mxu0 0.0
    %160 = vmatprep.subr.mxu0 0.0
    %161 = vmatpush1.msra.mxu0 0.0
    %162 = vmatprep.subr.mxu0 0.0
    %163 = vmatpush1.msra.mxu0 0.0
    %164 = vmatprep.subr.mxu0 0.0
    %165 = vmatpush1.msra.mxu0 0.0
    %166 = vmatprep.subr.mxu0 0.0
    %167 = vmatpush1.msra.mxu0 0.0
    %168 = vmatprep.subr.mxu0 0.0
    %169 = vmatpush1.msra.mxu0 0.0
    %170 = vmatprep.subr.mxu0 0.0
    %171 = vmatpush1.msra.mxu0 0.0
    %172 = vmatprep.subr.mxu0 0.0
    %173 = vmatpush1.msra.mxu0 0.0
    %174 = vmatprep.subr.mxu0 0.0
    %175 = vmatpush1.msra.mxu0 0.0
    %176 = vmatprep.subr.mxu0 0.0
    %177 = vmatpush1.msra.mxu0 0.0
    %178 = vmatprep.subr.mxu0 0.0
    %179 = vmatpush1.msra.mxu0 0.0
    %180 = vmatprep.subr.mxu0 0.0
    %181 = vmatpush1.msra.mxu0 0.0
    %182 = vmatprep.subr.mxu0 0.0
    %183 = vmatpush1.msra.mxu0 0.0
    %184 = vmatprep.subr.mxu0 0.0
    %185 = vmatpush1.msra.mxu0 0.0
    %186 = vmatprep.subr.mxu0 0.0
    %187 = vmatpush1.msra.mxu0 0.0
    %188 = vmatprep.subr.mxu0 0.0
    %189 = vmatpush1.msra.mxu0 0.0
    %190 = vmatprep.subr.mxu0 0.0
    %191 = vmatpush1.msra.mxu0 0.0
    %192 = vmatprep.subr.mxu0 0.0
    %193 = vmatpush1.msra.mxu0 0.0
    %194 = vmatprep.subr.mxu0 0.0
    %195 = vmatpush1.msra.mxu0 0.0
    %196 = vmatprep.subr.mxu0 0.0
    %197 = vmatpush1.msra.mxu0 0.0
    %198 = vmatprep.subr.mxu0 0.0
    %199 = vmatpush1.msra.mxu0 0.0
    %200 = vmatprep.subr.mxu0 0.0
    %201 = vmatpush1.msra.mxu0 0.0
    %202 = vmatprep.mubr.f32.mxu0 0.0
    %203 = vmatmul.mubr.f32.gmra.mrb[0].mxu0 %v133
    %v204 = vpop.f32.mrb[0].mxu0
    %v205 = vadd.f32 %v129, %v204
    %v206 = vpop.f32.mrb[0].mxu0
    %207 = vmatprep.mubr.f32.mxu0 0.0
    %208 = vmatmul.mubr.f32.gmra.mrb[0].mxu0 %v136
    %v209 = vpop.f32.mrb[0].mxu0
    %v210 = vadd.f32 %v129, %v209
    %v211 = vpop.f32.mrb[0].mxu0
    %212 = vdwg.mxu0
    %213 = vst [vmem:[#allocation2] sm:$0xff] %v205
    %214 = vst [vmem:[#allocation2 + $0x8] sm:$0xff] %v210
    // Predicated region
    $region22: #{tpu_custom_call.1} parent=1 // pred_check
      _
    $region23: #{tpu_custom_call.1} parent=1 // pred_check_branch
      %216 = sbr.rel (0) target = $region25
    $region24: #{tpu_custom_call.1} parent=1 // pred_region
      %s218 = ssub.s32 256, 256
      %219 = vsyncadd [#allocation3], %s218
      %s220 = sshll.u32 [#allocation2], 4
      %s221 = int_to_ptr.vmem [resolvable:$true] %s220
      %226 = dma.vmem_to_hbm [thread:$0]  %s221, 256, %s5, [#allocation3], 128, 128, 8
    $region25: #{tpu_custom_call.1} parent=1 // pred_fallthru
      _
    // Predicated region
    $region26: #{tpu_custom_call.1} parent=1 // pred_check
      _
    $region27: #{tpu_custom_call.1} parent=1 // pred_check_branch
      %228 = sbr.rel (0) target = $region29
    $region28: #{tpu_custom_call.1} parent=1 // pred_region
      %229 = dma.done [#allocation3], 256
    $region29: #{tpu_custom_call.1} parent=1 // pred_fallthru
      _
    %230 = vsyncpa [#allocation3], 1

</llo_original>
